<compile_context>
chip_gen: v7x
topology: tpu7x:2x2x1
jax: 0.10.0
libtpu: 0.0.40
codegen_flags: <defaults>
</compile_context>

<pallas_src>
import math
import functools

import jax
import jax.numpy as jnp
from jax.experimental import pallas as pl
from jax.experimental.pallas import tpu as pltpu


_NEG_BIG = -1.0e30  # finite "minus infinity" for masked (out-of-range) vocab columns


def _proj_logits_kernel(x_ref, w_ref, b_ref, logits_ref, lse_ref, m_ref, l_ref,
                        *, block_v, v_total, need_mask):
    """Single pass: raw logits tile + online logsumexp stats.

    Grid = (row_tiles, vocab_tiles); vocab axis is innermost ("arbitrary").
    """
    j = pl.program_id(1)

    @pl.when(j == 0)
    def _init():
        m_ref[...] = jnp.full(m_ref.shape, -jnp.inf, m_ref.dtype)
        l_ref[...] = jnp.zeros(l_ref.shape, l_ref.dtype)

    # (tm, tv) logits tile: MXU matmul with f32 accumulation, bias add on VPU.
    logits = jnp.dot(x_ref[...], w_ref[...], preferred_element_type=jnp.float32)
    logits = logits + b_ref[...].astype(jnp.float32)

    if need_mask:
        # Ragged last vocab tile: columns >= vocab_size read garbage weight /
        # bias; force them to a huge negative so they vanish from max / sum-exp.
        col = j * block_v + jax.lax.broadcasted_iota(jnp.int32, logits.shape, 1)
        logits = jnp.where(col < v_total, logits, _NEG_BIG)

    # Online max / sum-exp (one exp per element, one rescale per tile).
    m_prev = m_ref[...]
    m_new = jnp.maximum(m_prev, jnp.max(logits, axis=-1, keepdims=True))
    l_ref[...] = l_ref[...] * jnp.exp(m_prev - m_new) + jnp.sum(
        jnp.exp(logits - m_new), axis=-1, keepdims=True)
    m_ref[...] = m_new

    # Raw logits written exactly once, lane-dense.
    logits_ref[...] = logits.astype(logits_ref.dtype)

    @pl.when(j == pl.num_programs(1) - 1)
    def _emit_lse():
        # lse computed once per row tile (not once per vocab tile).
        lse_ref[...] = m_ref[...] + jnp.log(l_ref[...])


def _round_up(n, m):
    return (n + m - 1) // m * m


def _tile_vmem_bytes(tm, tv, d, op_size, logit_size):
    """Approximate VMEM footprint for one grid step (incl. double-buffering)."""
    return (2 * tm * d * op_size          # activation tile
            + 2 * d * tv * op_size        # streamed weight tile
            + 2 * 8 * tv * 4              # bias tile (sublane-padded)
            + 2 * tm * tv * logit_size    # logits output tile
            + 2 * tm * 4                  # lse output tile
            + 2 * tm * 4)                 # m / l scratch


@functools.partial(jax.jit,
                   static_argnames=("tm", "tv", "out_dtype", "operand_dtype"))
def projection_layer(x, w, b, *, tm=512, tv=1024,
                     out_dtype=jnp.float32, operand_dtype=jnp.bfloat16):
    """x: [B, S, d_model]; w: [d_model, vocab]; b: [vocab] -> log-probs [B, S, vocab]."""
    B, S, D = x.shape
    Dw, V = w.shape
    assert Dw == D, "weight must be laid out [d_model, vocab]"
    assert tm % 8 == 0 and tv % 128 == 0, "tm must be a multiple of 8, tv of 128"

    op_dtype = jnp.dtype(operand_dtype)
    out_dt = jnp.dtype(out_dtype)
    logits_dtype = jnp.float32 if out_dt == jnp.dtype(jnp.float32) else out_dt
    op_size = op_dtype.itemsize
    logit_size = jnp.dtype(logits_dtype).itemsize

    # Physical VMEM budget (v7x: 64 MiB/core; v5e/v6e: 128 MiB).
    try:
        vmem_cap = int(pltpu.get_tpu_info().vmem_capacity_bytes)
    except Exception:
        vmem_cap = 64 * 2**20  # conservative (v7x) fallback
    budget = vmem_cap - 16 * 2**20

    # Shrink requested tiles until the footprint fits physical VMEM.
    tm_req, tv_req = tm, tv
    while (_tile_vmem_bytes(tm_req, tv_req, D, op_size, logit_size) > budget
           and tv_req > 256 and (tv_req // 2) % 128 == 0):
        tv_req //= 2
    while (_tile_vmem_bytes(tm_req, tv_req, D, op_size, logit_size) > budget
           and tm_req > 128 and (tm_req // 2) % 8 == 0):
        tm_req //= 2
    # TODO(synk): if even (128, 256) tiles do not fit (huge d_model on v7x),
    # add a K (d_model) grid axis with a VMEM f32 accumulator.

    M = B * S
    tm_eff = min(tm_req, _round_up(M, 8))
    M_pad = _round_up(M, tm_eff)
    # Megacore occupancy (v7x): keep >= 2 row tiles when tiles stay large
    # enough that the extra weight restream is covered by compute.
    if M_pad // tm_eff < 2 and tm_eff >= 256:
        tm_eff //= 2
        M_pad = _round_up(M, tm_eff)

    if V <= 128:
        tv_eff = V                               # block == full vocab dim
    else:
        tv_eff = min(tv_req, (V // 128) * 128)   # multiple of 128, <= V
    n_v = pl.cdiv(V, tv_eff)
    V_out = n_v * tv_eff                         # output padded to whole tiles
    need_mask = (V % tv_eff) != 0

    # Activations: flatten, cast MXU operand dtype, pad rows to a whole tile.
    x2 = x.reshape(M, D).astype(op_dtype)
    if M_pad != M:
        x2 = jnp.pad(x2, ((0, M_pad - M), (0, 0)))
    # Weight stays unpadded.  NOTE: store W in `operand_dtype` at init so this
    # astype is a no-op (avoids a per-call HBM convert copy).
    w_op = w.astype(op_dtype)
    b_row = b.astype(jnp.float32).reshape(1, V)

    grid = (M_pad // tm_eff, n_v)

    kernel = functools.partial(_proj_logits_kernel,
                               block_v=tv_eff, v_total=V, need_mask=need_mask)

    # Advisory cost estimate (single matmul pass now).
    flops = 2 * M_pad * D * V_out
    transcendentals = M_pad * V_out + M_pad
    bytes_accessed = (x2.size * op_size
                      + grid[0] * (D * V * op_size + V * 4)
                      + M_pad * V_out * logit_size
                      + M_pad * 4)

    vmem_limit = int(min(vmem_cap - 4 * 2**20,
                         max(32 * 2**20,
                             int(1.25 * _tile_vmem_bytes(tm_eff, tv_eff, D,
                                                         op_size, logit_size)))))

    logits, lse = pl.pallas_call(
        kernel,
        out_shape=(jax.ShapeDtypeStruct((M_pad, V_out), logits_dtype),
                   jax.ShapeDtypeStruct((M_pad, 1), jnp.float32)),
        grid_spec=pltpu.PrefetchScalarGridSpec(
            num_scalar_prefetch=0,
            grid=grid,
            in_specs=[
                # Activation tile: constant across the vocab sweep -> fetched
                # once per row tile.
                pl.BlockSpec((tm_eff, D), lambda i, j: (i, 0)),
                # Weight streams along the vocab axis (unpadded; ragged last
                # tile masked in-kernel).
                pl.BlockSpec((D, tv_eff), lambda i, j: (0, j)),
                # Bias row streams with the weight.
                pl.BlockSpec((1, tv_eff), lambda i, j: (0, j)),
            ],
            out_specs=[
                # Raw logits: lane-dense (tm, tv) tile written once per step.
                pl.BlockSpec((tm_eff, tv_eff), lambda i, j: (i, j)),
                # Per-row logsumexp: resident across the vocab sweep.
                pl.BlockSpec((tm_eff, 1), lambda i, j: (i, 0)),
            ],
            scratch_shapes=[
                pltpu.VMEM((tm_eff, 1), jnp.float32),  # running row max
                pltpu.VMEM((tm_eff, 1), jnp.float32),  # running sum-exp
            ],
        ),
        compiler_params=pltpu.CompilerParams(
            dimension_semantics=("parallel", "arbitrary"),
            vmem_limit_bytes=vmem_limit,
        ),
        cost_estimate=pl.CostEstimate(
            flops=flops,
            transcendentals=transcendentals,
            bytes_accessed=bytes_accessed,
        ),
    )(x2, w_op, b_row)

    # log_softmax = logits - logsumexp: trivial elementwise, fused by XLA with
    # the slice/reshape (avoids restreaming W for a second in-kernel pass).
    out = (logits[:M, :V].astype(jnp.float32) - lse[:M]).astype(out_dt)
    return out.reshape(B, S, V)


if __name__ == "__main__":
    key = jax.random.PRNGKey(0)
    kx, kw, kb, kx2, kw2, kb2 = jax.random.split(key, 6)

    # --- Check 1: small shapes matching the module's forward (f32 operands) ----
    batch, seq, d_model, vocab_size = 2, 8, 32, 128
    bound = 1.0 / math.sqrt(d_model)
    w1 = jax.random.uniform(kw, (d_model, vocab_size), jnp.float32, -bound, bound)
    b1 = jax.random.uniform(kb, (vocab_size,), jnp.float32, -bound, bound)
    x1 = jax.random.normal(kx, (batch, seq, d_model), jnp.float32)

    out1 = jax.block_until_ready(
        projection_layer(x1, w1, b1, operand_dtype=jnp.float32))
    ref1 = jax.nn.log_softmax(
        jnp.einsum("bsd,dv->bsv", x1, w1,
                   precision=jax.lax.Precision.HIGHEST) + b1, axis=-1)
    assert out1.shape == (batch, seq, vocab_size)
    assert jnp.allclose(out1, ref1, atol=5e-3, rtol=5e-3)
    # log-probs must exponentiate-sum to ~1 per row
    assert jnp.allclose(jnp.sum(jnp.exp(out1), axis=-1), 1.0, atol=1e-3)

    # --- Check 2: multi-tile vocab streaming, in-kernel ragged-V masking, and
    # --- ragged-M padding with explicit small tiles -----------------------------
    batch2, seq2, d_model2, vocab2 = 2, 24, 64, 300
    bound2 = 1.0 / math.sqrt(d_model2)
    w2 = jax.random.uniform(kw2, (d_model2, vocab2), jnp.float32, -bound2, bound2)
    b2 = jax.random.uniform(kb2, (vocab2,), jnp.float32, -bound2, bound2)
    xb = jax.random.normal(kx2, (batch2, seq2, d_model2), jnp.float32)

    out2 = jax.block_until_ready(
        projection_layer(xb, w2, b2, tm=32, tv=128, operand_dtype=jnp.float32))
    ref2 = jax.nn.log_softmax(
        jnp.einsum("bsd,dv->bsv", xb, w2,
                   precision=jax.lax.Precision.HIGHEST) + b2, axis=-1)
    assert out2.shape == (batch2, seq2, vocab2)
    assert jnp.allclose(out2, ref2, atol=5e-3, rtol=5e-3)

    # --- Check 3: default fast path (bf16 MXU operands), looser tolerance -------
    out3 = jax.block_until_ready(projection_layer(x1, w1, b1))
    assert out3.shape == (batch, seq, vocab_size)
    assert jnp.allclose(out3, ref1, atol=7.5e-2, rtol=2e-2)

    print("KERNEL_OK")
</pallas_src>

<mosaic_0001>
module attributes {stable_mosaic.version = 11 : i64} {
  func.func @_proj_logits_kernel(%arg0: i32, %arg1: i32, %arg2: memref<16x32xf32, #tpu.memory_space<vmem>>, %arg3: memref<32x128xf32, #tpu.memory_space<vmem>>, %arg4: memref<1x128xf32, #tpu.memory_space<vmem>>, %arg5: memref<16x128xf32, #tpu.memory_space<vmem>>, %arg6: memref<16x1xf32, #tpu.memory_space<vmem>>, %arg7: memref<16x1xf32, #tpu.memory_space<vmem>>, %arg8: memref<16x1xf32, #tpu.memory_space<vmem>>) attributes {dimension_semantics = [#tpu.dimension_semantics<parallel>, #tpu.dimension_semantics<arbitrary>], iteration_bounds = array<i64: 1, 1>, scalar_prefetch = 0 : i64, scratch_operands = 2 : i64, tpu.core_type = #tpu.core_type<tc>, window_params = [{transform_indices = @transform_0, window_bounds = array<i64: 16, 32>}, {transform_indices = @transform_1, window_bounds = array<i64: 32, 128>}, {transform_indices = @transform_2, window_bounds = array<i64: 1, 128>}, {transform_indices = @transform_3, window_bounds = array<i64: 16, 128>}, {transform_indices = @transform_4, window_bounds = array<i64: 16, 1>}]} {
    %c0_i32 = arith.constant 0 : i32
    %0 = arith.cmpi eq, %arg1, %c0_i32 : i32
    %1 = arith.extui %0 : i1 to i32
    %c0_i32_0 = arith.constant 0 : i32
    %2 = arith.cmpi ne, %1, %c0_i32_0 : i32
    scf.if %2 {
      %cst_20 = arith.constant 0xFF800000 : f32
      %29 = vector.broadcast %cst_20 : f32 to vector<16x1xf32>
      %c0_21 = arith.constant 0 : index
      %c0_22 = arith.constant 0 : index
      %30 = vector.load %arg7[%c0_21, %c0_22] : memref<16x1xf32, #tpu.memory_space<vmem>>, vector<16x1xf32>
      tpu.vector_store %arg7[%c0_21, %c0_22], %29 {strides = array<i32>} : memref<16x1xf32, #tpu.memory_space<vmem>>, vector<16x1xf32>,
      %cst_23 = arith.constant 0.000000e+00 : f32
      %31 = vector.broadcast %cst_23 : f32 to vector<16x1xf32>
      %c0_24 = arith.constant 0 : index
      %c0_25 = arith.constant 0 : index
      %32 = vector.load %arg8[%c0_24, %c0_25] : memref<16x1xf32, #tpu.memory_space<vmem>>, vector<16x1xf32>
      tpu.vector_store %arg8[%c0_24, %c0_25], %31 {strides = array<i32>} : memref<16x1xf32, #tpu.memory_space<vmem>>, vector<16x1xf32>,
    } else {
    }
    %c0 = arith.constant 0 : index
    %c0_1 = arith.constant 0 : index
    %3 = vector.load %arg2[%c0, %c0_1] : memref<16x32xf32, #tpu.memory_space<vmem>>, vector<16x32xf32>
    %c0_2 = arith.constant 0 : index
    %c0_3 = arith.constant 0 : index
    %4 = vector.load %arg3[%c0_2, %c0_3] : memref<32x128xf32, #tpu.memory_space<vmem>>, vector<32x128xf32>
    %cst = arith.constant dense<0.000000e+00> : vector<16x128xf32>
    %5 = tpu.matmul %3, %4, %cst {dimension_numbers = #tpu.dot_dimension_numbers<[1], [0], [0], [1], [0, 0, 1, 1], [], []>} : vector<16x32xf32>, vector<32x128xf32>, vector<16x128xf32> -> vector<16x128xf32>
    %c0_4 = arith.constant 0 : index
    %c0_5 = arith.constant 0 : index
    %6 = vector.load %arg4[%c0_4, %c0_5] : memref<1x128xf32, #tpu.memory_space<vmem>>, vector<1x128xf32>
    %7 = vector.broadcast %6 : vector<1x128xf32> to vector<16x128xf32>
    %8 = arith.addf %5, %7 : vector<16x128xf32>
    %c0_6 = arith.constant 0 : index
    %c0_7 = arith.constant 0 : index
    %9 = vector.load %arg7[%c0_6, %c0_7] : memref<16x1xf32, #tpu.memory_space<vmem>>, vector<16x1xf32>
    %cst_8 = arith.constant dense<0xFF800000> : vector<16xf32>
    %10 = vector.multi_reduction <maximumf>, %8, %cst_8 [1] : vector<16x128xf32> to vector<16xf32>
    %11 = vector.shape_cast %10 : vector<16xf32> to vector<16x1xf32>
    %12 = arith.maximumf %9, %11 : vector<16x1xf32>
    %c0_9 = arith.constant 0 : index
    %c0_10 = arith.constant 0 : index
    %13 = vector.load %arg8[%c0_9, %c0_10] : memref<16x1xf32, #tpu.memory_space<vmem>>, vector<16x1xf32>
    %14 = arith.subf %9, %12 : vector<16x1xf32>
    %15 = math.exp %14 : vector<16x1xf32>
    %16 = arith.mulf %13, %15 : vector<16x1xf32>
    %17 = vector.broadcast %12 : vector<16x1xf32> to vector<16x128xf32>
    %18 = arith.subf %8, %17 : vector<16x128xf32>
    %19 = math.exp %18 : vector<16x128xf32>
    %cst_11 = arith.constant dense<0.000000e+00> : vector<16xf32>
    %20 = vector.multi_reduction <add>, %19, %cst_11 [1] : vector<16x128xf32> to vector<16xf32>
    %21 = vector.shape_cast %20 : vector<16xf32> to vector<16x1xf32>
    %22 = arith.addf %16, %21 : vector<16x1xf32>
    %c0_12 = arith.constant 0 : index
    %c0_13 = arith.constant 0 : index
    %23 = vector.load %arg8[%c0_12, %c0_13] : memref<16x1xf32, #tpu.memory_space<vmem>>, vector<16x1xf32>
    tpu.vector_store %arg8[%c0_12, %c0_13], %22 {strides = array<i32>} : memref<16x1xf32, #tpu.memory_space<vmem>>, vector<16x1xf32>,
    %c0_14 = arith.constant 0 : index
    %c0_15 = arith.constant 0 : index
    %24 = vector.load %arg7[%c0_14, %c0_15] : memref<16x1xf32, #tpu.memory_space<vmem>>, vector<16x1xf32>
    tpu.vector_store %arg7[%c0_14, %c0_15], %12 {strides = array<i32>} : memref<16x1xf32, #tpu.memory_space<vmem>>, vector<16x1xf32>,
    %c0_16 = arith.constant 0 : index
    %c0_17 = arith.constant 0 : index
    %25 = vector.load %arg5[%c0_16, %c0_17] : memref<16x128xf32, #tpu.memory_space<vmem>>, vector<16x128xf32>
    tpu.vector_store %arg5[%c0_16, %c0_17], %8 {strides = array<i32>} : memref<16x128xf32, #tpu.memory_space<vmem>>, vector<16x128xf32>,
    %c0_i32_18 = arith.constant 0 : i32
    %26 = arith.cmpi eq, %arg1, %c0_i32_18 : i32
    %27 = arith.extui %26 : i1 to i32
    %c0_i32_19 = arith.constant 0 : i32
    %28 = arith.cmpi ne, %27, %c0_i32_19 : i32
    scf.if %28 {
      %c0_20 = arith.constant 0 : index
      %c0_21 = arith.constant 0 : index
      %29 = vector.load %arg7[%c0_20, %c0_21] : memref<16x1xf32, #tpu.memory_space<vmem>>, vector<16x1xf32>
      %c0_22 = arith.constant 0 : index
      %c0_23 = arith.constant 0 : index
      %30 = vector.load %arg8[%c0_22, %c0_23] : memref<16x1xf32, #tpu.memory_space<vmem>>, vector<16x1xf32>
      %31 = math.log %30 : vector<16x1xf32>
      %32 = arith.addf %29, %31 : vector<16x1xf32>
      %c0_24 = arith.constant 0 : index
      %c0_25 = arith.constant 0 : index
      %33 = vector.load %arg6[%c0_24, %c0_25] : memref<16x1xf32, #tpu.memory_space<vmem>>, vector<16x1xf32>
      tpu.vector_store %arg6[%c0_24, %c0_25], %32 {strides = array<i32>} : memref<16x1xf32, #tpu.memory_space<vmem>>, vector<16x1xf32>,
    } else {
    }
    return
  }
  func.func @transform_0(%arg0: i32, %arg1: i32) -> (i32, i32) {
    %c0_i32 = arith.constant 0 : i32
    %c0_i32_0 = arith.constant 0 : i32
    return %arg0, %c0_i32 : i32, i32
  }
  func.func @transform_1(%arg0: i32, %arg1: i32) -> (i32, i32) {
    %c0_i32 = arith.constant 0 : i32
    %c0_i32_0 = arith.constant 0 : i32
    return %c0_i32, %arg1 : i32, i32
  }
  func.func @transform_2(%arg0: i32, %arg1: i32) -> (i32, i32) {
    %c0_i32 = arith.constant 0 : i32
    %c0_i32_0 = arith.constant 0 : i32
    return %c0_i32, %arg1 : i32, i32
  }
  func.func @transform_3(%arg0: i32, %arg1: i32) -> (i32, i32) {
    %c0_i32 = arith.constant 0 : i32
    return %arg0, %arg1 : i32, i32
  }
  func.func @transform_4(%arg0: i32, %arg1: i32) -> (i32, i32) {
    %c0_i32 = arith.constant 0 : i32
    %c0_i32_0 = arith.constant 0 : i32
    return %arg0, %c0_i32 : i32, i32
  }
}

</mosaic_0001>

<llo_original>
// kernel: projection_layer.1
$region0: #{projection_layer.1}
  #allocation0 [shape = 'u32[]', space=smem, size = 0x4, offset = 0x4, fixed_abs, tag = 'smem constant byte address 0x4 - core index']
  #allocation1 [shape = 'u32[144,128]{1,0:T(1,128)}', space=vmem, size = 0x12000, scoped, tag = 'internal scratch']
  #allocation2 [shape = 'f32[16,1]{1,0:T(8,128)}', space=vmem, size = 0x2000, scoped, tag = 'scratch operand']
  #allocation3 [shape = 'f32[16,1]{1,0:T(8,128)}', space=vmem, size = 0x2000, scoped, tag = 'scratch operand']
  %s0 = inlined_call_operand.hbm [shape: f32[16,32], index: 0, kind: input, shape index: {}]
  %s1 = inlined_call_operand.hbm [shape: f32[32,128], index: 1, kind: input, shape index: {}]
  %s2 = inlined_call_operand.vmem [shape: f32[1,128], index: 2, kind: input, shape index: {}]
  %s3 = inlined_call_operand.vmem [shape: f32[16,128], index: 3, kind: output, shape index: {0}]
  %s4 = inlined_call_operand.vmem [shape: f32[16,1], index: 4, kind: output, shape index: {1}]
  %5 = xla_tuple %s3, %s4
  %s6 = sld [smem:[#allocation0]]
  $region46: #{projection_layer.1} parent=0
    _
  %s8 = ssub.s32 1, %s6
  %s9 = scalar_select 0, %s8, %s6
  $region1: #{projection_layer.1} parent=0
    #allocation4 [shape = 'u8[8192]{0}', space=vmem, size = 0x2000, scoped, tag = 'input window, operand 0, single buffered']
    #allocation5 [shape = 's32[1]{0}', space=sflag, size = 0x4, scoped, tag = 'scoped memory for projection_layer.1']
    #allocation6 [shape = 'u8[16384]{0}', space=vmem, size = 0x4000, scoped, tag = 'input window, operand 1, single buffered']
    #allocation7 [shape = 's32[1]{0}', space=sflag, size = 0x4, scoped, tag = 'scoped memory for projection_layer.1']
    %10 = vsyncpa [#allocation5], 0
    %11 = vsyncpa [#allocation7], 0
    // Predicated region
    $region2: #{projection_layer.1} parent=1 // pred_check
      _
    $region3: #{projection_layer.1} parent=1 // pred_check_branch
      %13 = sbr.rel (0) target = $region5
    $region4: #{projection_layer.1} parent=1 // pred_region
      %s15 = ssub.s32 256, 256
      %16 = vsyncadd [#allocation5], %s15
      %s17 = sshll.u32 [#allocation4], 4
      %s18 = int_to_ptr.vmem [resolvable:$true] %s17
      %23 = dma.hbm_to_vmem [thread:$0]  %s0, 256, %s18, [#allocation5], 128, 128, 8
    $region5: #{projection_layer.1} parent=1 // pred_fallthru
      _
    // Predicated region
    $region6: #{projection_layer.1} parent=1 // pred_check
      _
    $region7: #{projection_layer.1} parent=1 // pred_check_branch
      %25 = sbr.rel (0) target = $region9
    $region8: #{projection_layer.1} parent=1 // pred_region
      %s27 = ssub.s32 512, 512
      %28 = vsyncadd [#allocation7], %s27
      %s29 = sshll.u32 [#allocation6], 4
      %s30 = int_to_ptr.vmem [resolvable:$true] %s29
      %35 = dma.hbm_to_vmem [thread:$0]  %s1, 512, %s30, [#allocation7], 128, 128, 8
    $region9: #{projection_layer.1} parent=1 // pred_fallthru
      _
    // Predicated region
    $region10: #{projection_layer.1} parent=1 // pred_check
      _
    $region11: #{projection_layer.1} parent=1 // pred_check_branch
      %37 = sbr.rel (0) target = $region13
    $region12: #{projection_layer.1} parent=1 // pred_region
      _
    $region13: #{projection_layer.1} parent=1 // pred_fallthru
      _
    // Predicated region
    $region14: #{projection_layer.1} parent=1 // pred_check
      _
    $region15: #{projection_layer.1} parent=1 // pred_check_branch
      %39 = sbr.rel (0) target = $region17
    $region16: #{projection_layer.1} parent=1 // pred_region
      %40 = dma.done [#allocation5], 256
    $region17: #{projection_layer.1} parent=1 // pred_fallthru
      _
    // Predicated region
    $region18: #{projection_layer.1} parent=1 // pred_check
      _
    $region19: #{projection_layer.1} parent=1 // pred_check_branch
      %42 = sbr.rel (0) target = $region21
    $region20: #{projection_layer.1} parent=1 // pred_region
      %43 = dma.done [#allocation7], 512
    $region21: #{projection_layer.1} parent=1 // pred_fallthru
      _
    %p44 = scmp.eq.s32.totalorder 0, 0
    // Predicated region
    $region22: #{projection_layer.1} parent=1 // pred_check
      %p45 = pneg %p44
    $region23: #{projection_layer.1} parent=1 // pred_check_branch
      %47 = sbr.rel (%p45) target = $region25
    $region24: #{projection_layer.1} parent=1 // pred_region
      %vm48 = vcmask 7168
      %49 = vst.msk [vmem:[#allocation2] sm:$0xff] %vm48, -inf
      %50 = vst.msk [vmem:[#allocation2 + $0x8] sm:$0xff] %vm48, -inf
      %51 = vst.msk [vmem:[#allocation3] sm:$0xff] %vm48, 0.0
      %52 = vst.msk [vmem:[#allocation3 + $0x8] sm:$0xff] %vm48, 0.0
    $region25: #{projection_layer.1} parent=1 // pred_fallthru
      _
    %v53 = vld [vmem:[#allocation4] sm:$0xff]
    %v54 = vld [vmem:[#allocation4 + $0x8] sm:$0xff]
    %v55 = vld [vmem:[#allocation6] sm:$0xff]
    %v56 = vld [vmem:[#allocation6 + $0x8] sm:$0xff]
    %v57 = vld [vmem:[#allocation6 + $0x10] sm:$0xff]
    %v58 = vld [vmem:[#allocation6 + $0x18] sm:$0xff]
    %v59 = vld [vmem:[%s2] sm:$0x1]
    %v61 = vlaneseq
    %v62 = vshrl.u32 %v61, 7
    %v63 = vsub.s32 0, %v62
    %v64 = vrot.slane %v59, %v63
    %vm66 = vcmask 261120
    %v68 = vsel %vm66, %v53, 0
    %v71 = vsel %vm66, %v54, 0
    %73 = vmatprep.subr.mxu0 0.0
    %74 = vmatpush1.msra.mxu0 %v55
    %75 = vmatprep.subr.mxu0 0.0
    %76 = vmatpush1.msra.mxu0 %v56
    %77 = vmatprep.subr.mxu0 0.0
    %78 = vmatpush1.msra.mxu0 %v57
    %79 = vmatprep.subr.mxu0 0.0
    %80 = vmatpush1.msra.mxu0 %v58
    %81 = vmatprep.subr.mxu0 0.0
    %82 = vmatpush1.msra.mxu0 0.0
    %83 = vmatprep.subr.mxu0 0.0
    %84 = vmatpush1.msra.mxu0 0.0
    %85 = vmatprep.subr.mxu0 0.0
    %86 = vmatpush1.msra.mxu0 0.0
    %87 = vmatprep.subr.mxu0 0.0
    %88 = vmatpush1.msra.mxu0 0.0
    %89 = vmatprep.subr.mxu0 0.0
    %90 = vmatpush1.msra.mxu0 0.0
    %91 = vmatprep.subr.mxu0 0.0
    %92 = vmatpush1.msra.mxu0 0.0
    %93 = vmatprep.subr.mxu0 0.0
    %94 = vmatpush1.msra.mxu0 0.0
    %95 = vmatprep.subr.mxu0 0.0
    %96 = vmatpush1.msra.mxu0 0.0
    %97 = vmatprep.subr.mxu0 0.0
    %98 = vmatpush1.msra.mxu0 0.0
    %99 = vmatprep.subr.mxu0 0.0
    %100 = vmatpush1.msra.mxu0 0.0
    %101 = vmatprep.subr.mxu0 0.0
    %102 = vmatpush1.msra.mxu0 0.0
    %103 = vmatprep.subr.mxu0 0.0
    %104 = vmatpush1.msra.mxu0 0.0
    %105 = vmatprep.subr.mxu0 0.0
    %106 = vmatpush1.msra.mxu0 0.0
    %107 = vmatprep.subr.mxu0 0.0
    %108 = vmatpush1.msra.mxu0 0.0
    %109 = vmatprep.subr.mxu0 0.0
    %110 = vmatpush1.msra.mxu0 0.0
    %111 = vmatprep.subr.mxu0 0.0
    %112 = vmatpush1.msra.mxu0 0.0
    %113 = vmatprep.subr.mxu0 0.0
    %114 = vmatpush1.msra.mxu0 0.0
    %115 = vmatprep.subr.mxu0 0.0
    %116 = vmatpush1.msra.mxu0 0.0
    %117 = vmatprep.subr.mxu0 0.0
    %118 = vmatpush1.msra.mxu0 0.0
    %119 = vmatprep.subr.mxu0 0.0
    %120 = vmatpush1.msra.mxu0 0.0
    %121 = vmatprep.subr.mxu0 0.0
    %122 = vmatpush1.msra.mxu0 0.0
    %123 = vmatprep.subr.mxu0 0.0
    %124 = vmatpush1.msra.mxu0 0.0
    %125 = vmatprep.subr.mxu0 0.0
    %126 = vmatpush1.msra.mxu0 0.0
    %127 = vmatprep.subr.mxu0 0.0
    %128 = vmatpush1.msra.mxu0 0.0
    %129 = vmatprep.subr.mxu0 0.0
    %130 = vmatpush1.msra.mxu0 0.0
    %131 = vmatprep.subr.mxu0 0.0
    %132 = vmatpush1.msra.mxu0 0.0
    %133 = vmatprep.subr.mxu0 0.0
    %134 = vmatpush1.msra.mxu0 0.0
    %135 = vmatprep.subr.mxu0 0.0
    %136 = vmatpush1.msra.mxu0 0.0
    %137 = vmatprep.mubr.f32.mxu0 0.0
    %138 = vmatmul.mubr.f32.gmra.mrb[0].mxu0 %v68
    %v139 = vpop.f32.mrb[0].mxu0
    %v140 = vadd.f32 %v64, %v139
    %v141 = vpop.f32.mrb[0].mxu0
    %142 = vmatprep.mubr.f32.mxu0 0.0
    %143 = vmatmul.mubr.f32.gmra.mrb[0].mxu0 %v71
    %v144 = vpop.f32.mrb[0].mxu0
    %v145 = vadd.f32 %v64, %v144
    %v146 = vpop.f32.mrb[0].mxu0
    %147 = vdwg.mxu0
    %v148 = vld [vmem:[#allocation2] sm:$0xff]
    %v149 = vld [vmem:[#allocation2 + $0x8] sm:$0xff]
    %150 = vmax.xlane.f32.xlu0 %v140
    %v151 = vpop.xlane.xlu0 %150
    %152 = vmax.xlane.f32.xlu0 %v145
    %v153 = vpop.xlane.xlu0 %152
    %v154 = vmax.f32 %v148, %v151
    %v155 = vmax.f32 %v149, %v153
    %v156 = vld [vmem:[#allocation3] sm:$0xff]
    %v157 = vld [vmem:[#allocation3 + $0x8] sm:$0xff]
    %v158 = vsub.f32 %v148, %v154
    %v159 = vsub.f32 %v149, %v155
    %v160 = vmul.f32 %v158, 1.442695
    %v161 = vpow.pop %v160
    %v162 = vmul.f32 %v159, 1.442695
    %v163 = vpow.pop %v162
    %v164 = vmul.f32 %v156, %v161
    %v165 = vmul.f32 %v157, %v163
    %167 = vset.pattern.permute.xlu0 0
    %168 = vperm.xlu0 %167, %v154
    %v169 = vpop.permute.xlu0 %168
    %172 = vset.pattern.permute.xlu0 0
    %173 = vperm.xlu0 %172, %v155
    %v174 = vpop.permute.xlu0 %173
    %v176 = vsub.f32 %v140, %v169
    %v177 = vsub.f32 %v145, %v174
    %v178 = vmul.f32 %v176, 1.442695
    %v179 = vpow.pop %v178
    %v180 = vmul.f32 %v177, 1.442695
    %v181 = vpow.pop %v180
    %182 = vadd.xlane.f32.xlu0 %v179
    %v183 = vpop.xlane.xlu0 %182
    %184 = vadd.xlane.f32.xlu0 %v181
    %v185 = vpop.xlane.xlu0 %184
    %v186 = vadd.f32 %v164, %v183
    %v187 = vadd.f32 %v165, %v185
    %vm188 = vcmask 7168
    %189 = vst.msk [vmem:[#allocation3] sm:$0xff] %vm188, %v186
    %190 = vst.msk [vmem:[#allocation3 + $0x8] sm:$0xff] %vm188, %v187
    %191 = vst.msk [vmem:[#allocation2] sm:$0xff] %vm188, %v154
    %192 = vst.msk [vmem:[#allocation2 + $0x8] sm:$0xff] %vm188, %v155
    %193 = vst [vmem:[%s3] sm:$0xff] %v140
    %194 = vst [vmem:[%s3 + $0x8] sm:$0xff] %v145
    // Predicated region
    $region26: #{projection_layer.1} parent=1 // pred_check
      %p195 = pneg %p44
    $region27: #{projection_layer.1} parent=1 // pred_check_branch
      %197 = sbr.rel (%p195) target = $region29
    $region28: #{projection_layer.1} parent=1 // pred_region
      %v198 = vld [vmem:[#allocation2] sm:$0xff]
      %v199 = vld [vmem:[#allocation2 + $0x8] sm:$0xff]
      %v200 = vld [vmem:[#allocation3] sm:$0xff]
      %v201 = vld [vmem:[#allocation3 + $0x8] sm:$0xff]
      %v202 = vlog2.pop %v200
      %v203 = vmul.f32 %v202, 0.6931472
      %v204 = vlog2.pop %v201
      %v205 = vmul.f32 %v204, 0.6931472
      %v206 = vadd.f32 %v198, %v203
      %v207 = vadd.f32 %v199, %v205
      %208 = vst.msk [vmem:[%s4] sm:$0xff] %vm188, %v206
      %209 = vst.msk [vmem:[%s4 + $0x8] sm:$0xff] %vm188, %v207
    $region29: #{projection_layer.1} parent=1 // pred_fallthru
      _
    // Predicated region
    $region30: #{projection_layer.1} parent=1 // pred_check
      _
    $region31: #{projection_layer.1} parent=1 // pred_check_branch
      %211 = sbr.rel (0) target = $region33
    $region32: #{projection_layer.1} parent=1 // pred_region
      _
    $region33: #{projection_layer.1} parent=1 // pred_fallthru
      _
    // Predicated region
    $region34: #{projection_layer.1} parent=1 // pred_check
      _
    $region35: #{projection_layer.1} parent=1 // pred_check_branch
      %213 = sbr.rel (0) target = $region37
    $region36: #{projection_layer.1} parent=1 // pred_region
      _
    $region37: #{projection_layer.1} parent=1 // pred_fallthru
      _
    // Predicated region
    $region38: #{projection_layer.1} parent=1 // pred_check
      _
    $region39: #{projection_layer.1} parent=1 // pred_check_branch
      %215 = sbr.rel (0) target = $region41
    $region40: #{projection_layer.1} parent=1 // pred_region
      _
    $region41: #{projection_layer.1} parent=1 // pred_fallthru
      _
    // Predicated region
    $region42: #{projection_layer.1} parent=1 // pred_check
      _
    $region43: #{projection_layer.1} parent=1 // pred_check_branch
      %217 = sbr.rel (0) target = $region45
    $region44: #{projection_layer.1} parent=1 // pred_region
      _
    $region45: #{projection_layer.1} parent=1 // pred_fallthru
      _
    %218 = vsyncpa [#allocation5], 1
    %219 = vsyncpa [#allocation7], 1

</llo_original>
